<compile_context>
chip_gen: v7x
topology: tpu7x:2x2x1
jax: 0.10.0
libtpu: 0.0.40
codegen_flags: <defaults>
</compile_context>

<pallas_src>
import jax
import jax.numpy as jnp
from jax.experimental import pallas as pl
from jax.experimental.pallas import tpu as pltpu


def _round_up(n, m):
    return ((n + m - 1) // m) * m


def generator_kernel(x_ref, w1_ref, b1_ref, w2_ref, b2_ref, o_ref):
    # Cast x to the MXU compute dtype in-kernel (avoids a wrapper-side HBM pass).
    x = x_ref[...].astype(w1_ref.dtype)
    # fc1: bf16 operands on the MXU, f32 accumulation.
    h = jnp.dot(x, w1_ref[...], preferred_element_type=jnp.float32)
    # Bias + ReLU epilogue in f32.
    h = jnp.maximum(h + b1_ref[...], 0.0)
    # fc2: cast activations back to the MXU compute dtype.
    y = jnp.dot(h.astype(w2_ref.dtype), w2_ref[...],
                preferred_element_type=jnp.float32)
    o_ref[...] = (y + b2_ref[...]).astype(o_ref.dtype)


def _choose_batch_tile(B, block_batch=1024):
    """Pick the batch tile size.

    - Small B: single full-extent tile (always a legal block shape).
    - Medium B (>= 512): split into >= 2 roughly equal 16-row-aligned tiles so
      both v7x TensorCores get work.
    - Large B: ~block_batch-row tiles, balanced so the last partial tile waste
      is small (Pallas masks the partial boundary block).
    """
    if B <= block_batch:
        if B >= 512:
            return _round_up(pl.cdiv(B, 2), 16)
        return B
    nsteps = pl.cdiv(B, block_batch)
    return _round_up(pl.cdiv(B, nsteps), 16)


def generator_forward(x, w1, b1, w2, b2, *, block_batch=1024,
                      compute_dtype=jnp.bfloat16):
    """x: (B, input_dim) f32, w1: (input_dim, hidden), b1: (1, hidden),
       w2: (hidden, output), b2: (1, output) -> (B, output) f32.

    Weights are stored transposed relative to PyTorch nn.Linear, i.e. (in, out),
    so the kernel computes plain x @ w matmuls on the MXU.
    """
    B, d_in = x.shape
    hidden = w1.shape[1]
    d_out = w2.shape[1]

    f32 = jnp.float32
    # Weights/biases are tiny; casting them once in the wrapper is negligible.
    w1c = w1.astype(compute_dtype)
    w2c = w2.astype(compute_dtype)
    b1c = b1.astype(f32)
    b2c = b2.astype(f32)
    x = x.astype(f32)

    bt = _choose_batch_tile(B, block_batch)
    grid = (pl.cdiv(B, bt),)

    flops = 2 * B * (d_in * hidden + hidden * d_out)
    bytes_accessed = (x.size * 4 + B * d_out * 4
                      + w1c.size * 2 + w2c.size * 2
                      + b1c.size * 4 + b2c.size * 4)
    cost = pl.CostEstimate(flops=flops, transcendentals=0,
                           bytes_accessed=bytes_accessed)

    out = pl.pallas_call(
        generator_kernel,
        out_shape=jax.ShapeDtypeStruct((B, d_out), f32),
        grid_spec=pl.GridSpec(
            grid=grid,
            in_specs=[
                # Activations march along the batch axis; last dim = full extent.
                pl.BlockSpec((bt, d_in), lambda i: (i, 0)),
                # Weights/biases: constant block index -> stay VMEM-resident.
                pl.BlockSpec((d_in, hidden), lambda i: (0, 0)),
                pl.BlockSpec((1, hidden), lambda i: (0, 0)),
                pl.BlockSpec((hidden, d_out), lambda i: (0, 0)),
                pl.BlockSpec((1, d_out), lambda i: (0, 0)),
            ],
            out_specs=pl.BlockSpec((bt, d_out), lambda i: (i, 0)),
        ),
        compiler_params=pltpu.CompilerParams(
            dimension_semantics=("parallel",)),
        cost_estimate=cost,
    )(x, w1c, b1c, w2c, b2c)

    return out


def reference_forward(x, w1, b1, w2, b2, compute_dtype=jnp.bfloat16):
    """Same numerics as the kernel: bf16 matmul operands, f32 accumulation."""
    h = jnp.dot(x.astype(compute_dtype), w1.astype(compute_dtype),
                preferred_element_type=jnp.float32) + b1
    h = jnp.maximum(h, 0.0)
    return jnp.dot(h.astype(compute_dtype), w2.astype(compute_dtype),
                   preferred_element_type=jnp.float32) + b2


if __name__ == "__main__":
    # Module dims from the spec: input_dim=100, output_dim=50; pick hidden_dim=32.
    input_dim, hidden_dim, output_dim = 100, 32, 50
    batch = 8

    key = jax.random.PRNGKey(0)
    kx, kw1, kb1, kw2, kb2 = jax.random.split(key, 5)

    # Deterministic synthetic parameters (nn.Linear shapes, stored as (in, out)).
    x = jax.random.normal(kx, (batch, input_dim), dtype=jnp.float32)
    w1 = jax.random.normal(kw1, (input_dim, hidden_dim), dtype=jnp.float32) * 0.1
    b1 = jax.random.normal(kb1, (1, hidden_dim), dtype=jnp.float32) * 0.1
    w2 = jax.random.normal(kw2, (hidden_dim, output_dim), dtype=jnp.float32) * 0.1
    b2 = jax.random.normal(kb2, (1, output_dim), dtype=jnp.float32) * 0.1

    out = generator_forward(x, w1, b1, w2, b2)
    jax.block_until_ready(out)

    ref = reference_forward(x, w1, b1, w2, b2)
    assert out.shape == (batch, output_dim)
    assert jnp.allclose(out, ref, atol=1e-2, rtol=1e-2)

    print("KERNEL_OK")
</pallas_src>

<mosaic_0001>
module attributes {stable_mosaic.version = 11 : i64} {
  func.func @generator_kernel(%arg0: i32, %arg1: memref<8x100xf32, #tpu.memory_space<vmem>>, %arg2: memref<100x32xbf16, #tpu.memory_space<vmem>>, %arg3: memref<1x32xf32, #tpu.memory_space<vmem>>, %arg4: memref<32x50xbf16, #tpu.memory_space<vmem>>, %arg5: memref<1x50xf32, #tpu.memory_space<vmem>>, %arg6: memref<8x50xf32, #tpu.memory_space<vmem>>) attributes {dimension_semantics = [#tpu.dimension_semantics<parallel>], iteration_bounds = array<i64: 1>, scalar_prefetch = 0 : i64, scratch_operands = 0 : i64, tpu.core_type = #tpu.core_type<tc>, window_params = [{transform_indices = @transform_0, window_bounds = array<i64: 8, 100>}, {pipeline_mode = #tpu.pipeline_mode<synchronous>, transform_indices = @transform_1, window_bounds = array<i64: 100, 32>}, {pipeline_mode = #tpu.pipeline_mode<synchronous>, transform_indices = @transform_2, window_bounds = array<i64: 1, 32>}, {pipeline_mode = #tpu.pipeline_mode<synchronous>, transform_indices = @transform_3, window_bounds = array<i64: 32, 50>}, {pipeline_mode = #tpu.pipeline_mode<synchronous>, transform_indices = @transform_4, window_bounds = array<i64: 1, 50>}, {transform_indices = @transform_5, window_bounds = array<i64: 8, 50>}]} {
    %c0 = arith.constant 0 : index
    %c0_0 = arith.constant 0 : index
    %0 = vector.load %arg1[%c0, %c0_0] : memref<8x100xf32, #tpu.memory_space<vmem>>, vector<8x100xf32>
    %1 = arith.truncf %0 : vector<8x100xf32> to vector<8x100xbf16>
    %c0_1 = arith.constant 0 : index
    %c0_2 = arith.constant 0 : index
    %2 = vector.load %arg2[%c0_1, %c0_2] : memref<100x32xbf16, #tpu.memory_space<vmem>>, vector<100x32xbf16>
    %cst = arith.constant dense<0.000000e+00> : vector<8x32xf32>
    %3 = tpu.matmul %1, %2, %cst {dimension_numbers = #tpu.dot_dimension_numbers<[1], [0], [0], [1], [0, 0, 1, 1], [], []>} : vector<8x100xbf16>, vector<100x32xbf16>, vector<8x32xf32> -> vector<8x32xf32>
    %c0_3 = arith.constant 0 : index
    %c0_4 = arith.constant 0 : index
    %4 = vector.load %arg3[%c0_3, %c0_4] : memref<1x32xf32, #tpu.memory_space<vmem>>, vector<1x32xf32>
    %5 = vector.broadcast %4 : vector<1x32xf32> to vector<8x32xf32>
    %6 = arith.addf %3, %5 : vector<8x32xf32>
    %cst_5 = arith.constant 0.000000e+00 : f32
    %7 = vector.broadcast %cst_5 : f32 to vector<8x32xf32>
    %8 = arith.maximumf %6, %7 : vector<8x32xf32>
    %9 = arith.truncf %8 : vector<8x32xf32> to vector<8x32xbf16>
    %c0_6 = arith.constant 0 : index
    %c0_7 = arith.constant 0 : index
    %10 = vector.load %arg4[%c0_6, %c0_7] : memref<32x50xbf16, #tpu.memory_space<vmem>>, vector<32x50xbf16>
    %cst_8 = arith.constant dense<0.000000e+00> : vector<8x50xf32>
    %11 = tpu.matmul %9, %10, %cst_8 {dimension_numbers = #tpu.dot_dimension_numbers<[1], [0], [0], [1], [0, 0, 1, 1], [], []>} : vector<8x32xbf16>, vector<32x50xbf16>, vector<8x50xf32> -> vector<8x50xf32>
    %c0_9 = arith.constant 0 : index
    %c0_10 = arith.constant 0 : index
    %12 = vector.load %arg5[%c0_9, %c0_10] : memref<1x50xf32, #tpu.memory_space<vmem>>, vector<1x50xf32>
    %13 = vector.broadcast %12 : vector<1x50xf32> to vector<8x50xf32>
    %14 = arith.addf %11, %13 : vector<8x50xf32>
    %c0_11 = arith.constant 0 : index
    %c0_12 = arith.constant 0 : index
    %15 = vector.load %arg6[%c0_11, %c0_12] : memref<8x50xf32, #tpu.memory_space<vmem>>, vector<8x50xf32>
    tpu.vector_store %arg6[%c0_11, %c0_12], %14 {strides = array<i32>} : memref<8x50xf32, #tpu.memory_space<vmem>>, vector<8x50xf32>,
    return
  }
  func.func @transform_0(%arg0: i32) -> (i32, i32) {
    %c0_i32 = arith.constant 0 : i32
    %c0_i32_0 = arith.constant 0 : i32
    return %arg0, %c0_i32 : i32, i32
  }
  func.func @transform_1(%arg0: i32) -> (i32, i32) {
    %c0_i32 = arith.constant 0 : i32
    %c0_i32_0 = arith.constant 0 : i32
    %c0_i32_1 = arith.constant 0 : i32
    return %c0_i32, %c0_i32_0 : i32, i32
  }
  func.func @transform_2(%arg0: i32) -> (i32, i32) {
    %c0_i32 = arith.constant 0 : i32
    %c0_i32_0 = arith.constant 0 : i32
    %c0_i32_1 = arith.constant 0 : i32
    return %c0_i32, %c0_i32_0 : i32, i32
  }
  func.func @transform_3(%arg0: i32) -> (i32, i32) {
    %c0_i32 = arith.constant 0 : i32
    %c0_i32_0 = arith.constant 0 : i32
    %c0_i32_1 = arith.constant 0 : i32
    return %c0_i32, %c0_i32_0 : i32, i32
  }
  func.func @transform_4(%arg0: i32) -> (i32, i32) {
    %c0_i32 = arith.constant 0 : i32
    %c0_i32_0 = arith.constant 0 : i32
    %c0_i32_1 = arith.constant 0 : i32
    return %c0_i32, %c0_i32_0 : i32, i32
  }
  func.func @transform_5(%arg0: i32) -> (i32, i32) {
    %c0_i32 = arith.constant 0 : i32
    %c0_i32_0 = arith.constant 0 : i32
    return %arg0, %c0_i32 : i32, i32
  }
}

</mosaic_0001>

<llo_original>
// kernel: tpu_custom_call.1
$region0: #{tpu_custom_call.1}
  #allocation0 [shape = 'u32[]', space=smem, size = 0x4, offset = 0x4, fixed_abs, tag = 'smem constant byte address 0x4 - core index']
  #allocation1 [shape = 'u32[144,128]{1,0:T(1,128)}', space=vmem, size = 0x12000, scoped, tag = 'internal scratch']
  %s0 = inlined_call_operand.vmem [shape: f32[8,100], index: 0, kind: input, shape index: {}]
  %s1 = inlined_call_operand.vmem [shape: bf16[100,32], index: 1, kind: input, shape index: {}]
  %s2 = inlined_call_operand.vmem [shape: f32[1,32], index: 2, kind: input, shape index: {}]
  %s3 = inlined_call_operand.vmem [shape: bf16[32,50], index: 3, kind: input, shape index: {}]
  %s4 = inlined_call_operand.vmem [shape: f32[1,50], index: 4, kind: input, shape index: {}]
  %s5 = inlined_call_operand.hbm [shape: f32[8,50], index: 5, kind: output, shape index: {}]
  %s6 = sld [smem:[#allocation0]]
  $region30: #{tpu_custom_call.1} parent=0
    _
  %s8 = ssub.s32 1, %s6
  %s9 = scalar_select 0, %s8, %s6
  $region1: #{tpu_custom_call.1} parent=0
    #allocation2 [shape = 'u8[4096]{0}', space=vmem, size = 0x1000, scoped, tag = 'output window, operand 0, single buffered']
    #allocation3 [shape = 's32[1]{0}', space=sflag, size = 0x4, scoped, tag = 'scoped memory for tpu_custom_call.1']
    %10 = vsyncpa [#allocation3], 0
    // Predicated region
    $region2: #{tpu_custom_call.1} parent=1 // pred_check
      _
    $region3: #{tpu_custom_call.1} parent=1 // pred_check_branch
      %12 = sbr.rel (0) target = $region5
    $region4: #{tpu_custom_call.1} parent=1 // pred_region
      _
    $region5: #{tpu_custom_call.1} parent=1 // pred_fallthru
      _
    // Predicated region
    $region6: #{tpu_custom_call.1} parent=1 // pred_check
      _
    $region7: #{tpu_custom_call.1} parent=1 // pred_check_branch
      %14 = sbr.rel (0) target = $region9
    $region8: #{tpu_custom_call.1} parent=1 // pred_region
      _
    $region9: #{tpu_custom_call.1} parent=1 // pred_fallthru
      _
    // Predicated region
    $region10: #{tpu_custom_call.1} parent=1 // pred_check
      _
    $region11: #{tpu_custom_call.1} parent=1 // pred_check_branch
      %16 = sbr.rel (0) target = $region13
    $region12: #{tpu_custom_call.1} parent=1 // pred_region
      _
    $region13: #{tpu_custom_call.1} parent=1 // pred_fallthru
      _
    // Predicated region
    $region14: #{tpu_custom_call.1} parent=1 // pred_check
      _
    $region15: #{tpu_custom_call.1} parent=1 // pred_check_branch
      %18 = sbr.rel (0) target = $region17
    $region16: #{tpu_custom_call.1} parent=1 // pred_region
      _
    $region17: #{tpu_custom_call.1} parent=1 // pred_fallthru
      _
    // Predicated region
    $region18: #{tpu_custom_call.1} parent=1 // pred_check
      _
    $region19: #{tpu_custom_call.1} parent=1 // pred_check_branch
      %20 = sbr.rel (0) target = $region21
    $region20: #{tpu_custom_call.1} parent=1 // pred_region
      _
    $region21: #{tpu_custom_call.1} parent=1 // pred_fallthru
      _
    %v22 = vld [vmem:[%s0] sm:$0xff]
    %v23 = vpack.c.bf16 %v22, %v22
    %v24 = vld [vmem:[%s1] sm:$0xf]
    %v25 = vld [vmem:[%s1 + $0x4] sm:$0xf]
    %v26 = vld [vmem:[%s1 + $0x8] sm:$0xf]
    %v27 = vld [vmem:[%s1 + $0xc] sm:$0xf]
    %v28 = vld [vmem:[%s1 + $0x10] sm:$0xf]
    %v29 = vld [vmem:[%s1 + $0x14] sm:$0xf]
    %v30 = vld [vmem:[%s1 + $0x18] sm:$0xf]
    %v31 = vld [vmem:[%s1 + $0x1c] sm:$0xf]
    %v32 = vld [vmem:[%s1 + $0x20] sm:$0xf]
    %v33 = vld [vmem:[%s1 + $0x24] sm:$0xf]
    %v34 = vld [vmem:[%s1 + $0x28] sm:$0xf]
    %v35 = vld [vmem:[%s1 + $0x2c] sm:$0xf]
    %v36 = vld [vmem:[%s1 + $0x30] sm:$0x3]
    %v37 = vld [vmem:[%s2] sm:$0x1]
    %v39 = vlaneseq
    %v40 = vshrl.u32 %v39, 7
    %v41 = vsub.s32 0, %v40
    %v42 = vrot.slane %v37, %v41
    %v57 = vunpack.c.l.b16 %v24
    %v58 = vunpack.c.l.b16 %v25
    %v59 = vunpack.c.l.b16 %v26
    %v60 = vunpack.c.l.b16 %v27
    %v61 = vunpack.c.l.b16 %v28
    %v62 = vunpack.c.l.b16 %v29
    %v63 = vunpack.c.l.b16 %v30
    %v64 = vunpack.c.l.b16 %v31
    %v65 = vunpack.c.l.b16 %v32
    %v66 = vunpack.c.l.b16 %v33
    %v67 = vunpack.c.l.b16 %v34
    %v68 = vunpack.c.l.b16 %v35
    %v69 = vunpack.c.l.b16 %v36
    %v70 = vpack.c.b16 %v58, %v57
    %v71 = vpack.c.b16 %v60, %v59
    %v72 = vpack.c.b16 %v62, %v61
    %v73 = vpack.c.b16 %v64, %v63
    %v74 = vpack.c.b16 %v66, %v65
    %v75 = vpack.c.b16 %v68, %v67
    %v76 = vpack.c.b16 %v69, %v69
    %vm83 = vcmask 818176
    %v85 = vsel %vm83, %v23, 0
    %vm87 = vcmask 1041408
    %v89 = vsel %vm87, %v76, 0
    %91 = vmatprep.subr.bf16.mxu0 0
    %92 = vmatpush1.bf16.msra.mxu0 %v70
    %93 = vmatprep.subr.bf16.mxu0 0
    %94 = vmatpush1.bf16.msra.mxu0 %v71
    %95 = vmatprep.subr.bf16.mxu0 0
    %96 = vmatpush1.bf16.msra.mxu0 %v72
    %97 = vmatprep.subr.bf16.mxu0 0
    %98 = vmatpush1.bf16.msra.mxu0 %v73
    %99 = vmatprep.subr.bf16.mxu0 0
    %100 = vmatpush1.bf16.msra.mxu0 %v74
    %101 = vmatprep.subr.bf16.mxu0 0
    %102 = vmatpush1.bf16.msra.mxu0 %v75
    %103 = vmatprep.subr.bf16.mxu0 0
    %104 = vmatpush1.bf16.msra.mxu0 %v89
    %105 = vmatprep.subr.bf16.mxu0 0
    %106 = vmatpush1.bf16.msra.mxu0 0
    %107 = vmatprep.subr.bf16.mxu0 0
    %108 = vmatpush1.bf16.msra.mxu0 0
    %109 = vmatprep.subr.bf16.mxu0 0
    %110 = vmatpush1.bf16.msra.mxu0 0
    %111 = vmatprep.subr.bf16.mxu0 0
    %112 = vmatpush1.bf16.msra.mxu0 0
    %113 = vmatprep.subr.bf16.mxu0 0
    %114 = vmatpush1.bf16.msra.mxu0 0
    %115 = vmatprep.subr.bf16.mxu0 0
    %116 = vmatpush1.bf16.msra.mxu0 0
    %117 = vmatprep.subr.bf16.mxu0 0
    %118 = vmatpush1.bf16.msra.mxu0 0
    %119 = vmatprep.subr.bf16.mxu0 0
    %120 = vmatpush1.bf16.msra.mxu0 0
    %121 = vmatprep.subr.bf16.mxu0 0
    %122 = vmatpush1.bf16.msra.mxu0 0
    %123 = vmatprep.mubr.bf16.mxu0 0
    %124 = vmatmul.mubr.bf16.gmra.mrb[0].mxu0 %v85
    %v125 = vpop.f32.mrb[0].mxu0
    %v126 = vadd.f32 %v42, %v125
    %v127 = vpop.f32.mrb[0].mxu0
    %v128 = vpop.f32.mrb[0].mxu0
    %v129 = vpop.f32.mrb[0].mxu0
    %130 = vdwg.mxu0
    %v131 = vmax.f32 %v126, 0.0
    %v132 = vpack.c.bf16 %v131, %v131
    %v133 = vld [vmem:[%s3] sm:$0xf]
    %v134 = vld [vmem:[%s3 + $0x4] sm:$0xf]
    %v135 = vld [vmem:[%s3 + $0x8] sm:$0xf]
    %v136 = vld [vmem:[%s3 + $0xc] sm:$0xf]
    %v137 = vld [vmem:[%s4] sm:$0x1]
    %v139 = vlaneseq
    %v140 = vshrl.u32 %v139, 7
    %v141 = vsub.s32 0, %v140
    %v142 = vrot.slane %v137, %v141
    %v148 = vunpack.c.l.b16 %v133
    %v149 = vunpack.c.l.b16 %v134
    %v150 = vunpack.c.l.b16 %v135
    %v151 = vunpack.c.l.b16 %v136
    %v152 = vpack.c.b16 %v149, %v148
    %v153 = vpack.c.b16 %v151, %v150
    %vm156 = vcmask 261120
    %v158 = vsel %vm156, %v132, 0
    %160 = vmatprep.subr.bf16.mxu0 0
    %161 = vmatpush1.bf16.msra.mxu0 %v152
    %162 = vmatprep.subr.bf16.mxu0 0
    %163 = vmatpush1.bf16.msra.mxu0 %v153
    %164 = vmatprep.subr.bf16.mxu0 0
    %165 = vmatpush1.bf16.msra.mxu0 0
    %166 = vmatprep.subr.bf16.mxu0 0
    %167 = vmatpush1.bf16.msra.mxu0 0
    %168 = vmatprep.subr.bf16.mxu0 0
    %169 = vmatpush1.bf16.msra.mxu0 0
    %170 = vmatprep.subr.bf16.mxu0 0
    %171 = vmatpush1.bf16.msra.mxu0 0
    %172 = vmatprep.subr.bf16.mxu0 0
    %173 = vmatpush1.bf16.msra.mxu0 0
    %174 = vmatprep.subr.bf16.mxu0 0
    %175 = vmatpush1.bf16.msra.mxu0 0
    %176 = vmatprep.subr.bf16.mxu0 0
    %177 = vmatpush1.bf16.msra.mxu0 0
    %178 = vmatprep.subr.bf16.mxu0 0
    %179 = vmatpush1.bf16.msra.mxu0 0
    %180 = vmatprep.subr.bf16.mxu0 0
    %181 = vmatpush1.bf16.msra.mxu0 0
    %182 = vmatprep.subr.bf16.mxu0 0
    %183 = vmatpush1.bf16.msra.mxu0 0
    %184 = vmatprep.subr.bf16.mxu0 0
    %185 = vmatpush1.bf16.msra.mxu0 0
    %186 = vmatprep.subr.bf16.mxu0 0
    %187 = vmatpush1.bf16.msra.mxu0 0
    %188 = vmatprep.subr.bf16.mxu0 0
    %189 = vmatpush1.bf16.msra.mxu0 0
    %190 = vmatprep.subr.bf16.mxu0 0
    %191 = vmatpush1.bf16.msra.mxu0 0
    %192 = vmatprep.mubr.bf16.mxu0 0
    %193 = vmatmul.mubr.bf16.gmra.mrb[0].mxu0 %v158
    %v194 = vpop.f32.mrb[0].mxu0
    %v195 = vadd.f32 %v142, %v194
    %v196 = vpop.f32.mrb[0].mxu0
    %v197 = vpop.f32.mrb[0].mxu0
    %v198 = vpop.f32.mrb[0].mxu0
    %199 = vdwg.mxu0
    %vm200 = vcmask 408576
    %201 = vst.msk [vmem:[#allocation2] sm:$0xff] %vm200, %v195
    // Predicated region
    $region22: #{tpu_custom_call.1} parent=1 // pred_check
      _
    $region23: #{tpu_custom_call.1} parent=1 // pred_check_branch
      %203 = sbr.rel (0) target = $region25
    $region24: #{tpu_custom_call.1} parent=1 // pred_region
      %s205 = ssub.s32 128, 128
      %206 = vsyncadd [#allocation3], %s205
      %s208 = sshll.u32 [#allocation2], 4
      %s209 = int_to_ptr.vmem [resolvable:$true] %s208
      %211 = dma.vmem_to_hbm [thread:$0]  %s209, 128, %s5, [#allocation3]
    $region25: #{tpu_custom_call.1} parent=1 // pred_fallthru
      _
    // Predicated region
    $region26: #{tpu_custom_call.1} parent=1 // pred_check
      _
    $region27: #{tpu_custom_call.1} parent=1 // pred_check_branch
      %213 = sbr.rel (0) target = $region29
    $region28: #{tpu_custom_call.1} parent=1 // pred_region
      %214 = dma.done [#allocation3], 128
    $region29: #{tpu_custom_call.1} parent=1 // pred_fallthru
      _
    %215 = vsyncpa [#allocation3], 1

</llo_original>
